<compile_context>
chip_gen: v5e
topology: v5e:2x2
jax: 0.10.0
libtpu: 0.0.40
codegen_flags: <defaults>
</compile_context>

<pallas_src>
import functools

import jax
import jax.numpy as jnp
from jax import lax
from jax.experimental import pallas as pl
from jax.experimental.pallas import tpu as pltpu

IGNORE_INDEX = -1
_NEG = -1e30  # effectively -inf for padded vocab columns / max init


def _round_up(x, m):
    return ((x + m - 1) // m) * m


def _masked_ce_kernel(flags_ref, x_ref, w_ref, labels_ref, out_ref,
                      m_ref, l_ref, ll_ref, *, vocab_size, vocab_tile, mask_tail):
    """Online-softmax masked cross-entropy over vocab tiles.

    flags_ref  : (num_row_tiles,) i32  SMEM  per-row-tile "has valid label"
    x_ref      : (TN, H)  bf16  hidden block
    w_ref      : (H, TV)  bf16  LM-head weight block
    labels_ref : (TN, 1)  i32   shifted labels (IGNORE_INDEX where masked)
    out_ref    : (TN, 128) f32  per-row masked NLL (broadcast over lanes)
    m/l/ll_ref : (TN, 1)  f32   running max / exp-sum / label-logit scratch
    """
    i = pl.program_id(0)
    k = pl.program_id(1)
    last_k = pl.num_programs(1) - 1
    has_valid = flags_ref[i] > 0

    @pl.when(jnp.logical_and(has_valid, k == 0))
    def _init():
        m_ref[...] = jnp.full_like(m_ref, _NEG)
        l_ref[...] = jnp.zeros_like(l_ref)
        ll_ref[...] = jnp.zeros_like(ll_ref)

    def _accumulate(apply_tail_mask):
        # MXU matmul: bf16 inputs, f32 accumulation.
        logits = jnp.dot(x_ref[...], w_ref[...],
                         preferred_element_type=jnp.float32)      # (TN, TV) f32
        # Global vocab column ids (needed for the label-logit select).
        col = k * vocab_tile + lax.broadcasted_iota(jnp.int32, logits.shape, 1)
        if apply_tail_mask:
            # Only the last vocab tile can contain padded columns.
            logits = jnp.where(col < vocab_size, logits, _NEG)

        labels = labels_ref[...]                                   # (TN, 1) i32
        m_prev = m_ref[...]
        m_new = jnp.maximum(m_prev, jnp.max(logits, axis=-1, keepdims=True))
        l_ref[...] = (jnp.exp(m_prev - m_new) * l_ref[...]
                      + jnp.sum(jnp.exp(logits - m_new), axis=-1, keepdims=True))
        # Fused label-logit "gather": select instead of a float one-hot matmul.
        ll_ref[...] = ll_ref[...] + jnp.sum(
            jnp.where(col == labels, logits, 0.0), axis=-1, keepdims=True)
        m_ref[...] = m_new

    if mask_tail:
        @pl.when(jnp.logical_and(has_valid, k != last_k))
        def _accum_interior():
            _accumulate(False)

        @pl.when(jnp.logical_and(has_valid, k == last_k))
        def _accum_tail():
            _accumulate(True)
    else:
        @pl.when(has_valid)
        def _accum_all():
            _accumulate(False)

    @pl.when(jnp.logical_and(k == last_k, has_valid))
    def _finalize():
        labels = labels_ref[...]
        valid = (labels != IGNORE_INDEX).astype(jnp.float32)       # (TN, 1)
        nll = (m_ref[...] + jnp.log(l_ref[...])) - ll_ref[...]     # lse - label_logit
        out_ref[...] = jnp.broadcast_to(nll * valid, out_ref.shape)

    @pl.when(jnp.logical_and(k == last_k, jnp.logical_not(has_valid)))
    def _skipped_tile():
        out_ref[...] = jnp.zeros_like(out_ref)


def prepare_lm_head(w_head, *, vocab_tile=1024):
    """Hoisted out of the per-step path: cast LM head to bf16 and pad vocab.

    Call once per training run; the per-step loss then streams the weight
    straight from HBM with no extra cast/pad pass.
    """
    h, v = w_head.shape
    tv = max(128, _round_up(min(vocab_tile, _round_up(v, 128)), 128))
    v_pad = _round_up(v, tv)
    w = w_head.astype(jnp.bfloat16)
    if v_pad != v:
        w = jnp.pad(w, ((0, 0), (0, v_pad - v)))
    return w, v


def masked_cross_entropy_loss(hidden, w_head, labels, *, vocab_size=None,
                              row_tile=512, vocab_tile=1024,
                              vmem_budget_bytes=48 * 1024 * 1024):
    """hidden: (N, H), w_head: (H, V_pad) ideally bf16 from prepare_lm_head,
    labels: (N,) int32 with IGNORE_INDEX for masked positions.
    NOTE: valid labels must lie in [0, vocab_size)."""
    n, h = hidden.shape
    h2, v_phys = w_head.shape
    assert h == h2
    v = int(vocab_size) if vocab_size is not None else v_phys
    assert v <= v_phys

    # Hot path expects a pre-cast / pre-padded LM head; fall back (one extra
    # full HxV HBM pass) if a raw f32 / unpadded weight is passed in.
    if w_head.dtype != jnp.bfloat16:
        w_head = w_head.astype(jnp.bfloat16)
    if v_phys % 128 != 0:
        v_new = _round_up(v_phys, 128)
        w_head = jnp.pad(w_head, ((0, 0), (0, v_new - v_phys)))
        v_phys = v_new

    # ---- tile selection (256-aligned rows when N allows; tv | v_phys) ----
    if n >= 256:
        tn = min(_round_up(row_tile, 256), _round_up(n, 256))
    else:
        tn = min(_round_up(row_tile, 16), _round_up(n, 16))
    tv = min(_round_up(vocab_tile, 128), v_phys)
    while v_phys % tv != 0:
        tv -= 128

    def _blocks_bytes(tn_, tv_):
        return (2 * tn_ * h * 2          # x block, bf16, double-buffered
                + 2 * h * tv_ * 2        # w block, bf16, double-buffered
                + 2 * tn_ * 1 * 4        # labels block
                + 2 * tn_ * 128 * 4      # out block
                + 3 * tn_ * 4)           # f32 accumulators

    # Shrink vocab tile first, then row tile, to fit the VMEM budget
    # (48 MiB default keeps the same code safe on v7x's 64 MiB VMEM).
    while _blocks_bytes(tn, tv) > vmem_budget_bytes and tv > 128:
        tv -= 128
        while v_phys % tv != 0:
            tv -= 128
    while _blocks_bytes(tn, tv) > vmem_budget_bytes and tn > 256:
        tn = max(256, tn - 256)

    n_pad = _round_up(n, tn)

    x = hidden.astype(jnp.bfloat16)
    labels_i32 = labels.astype(jnp.int32)
    if n_pad != n:
        x = jnp.pad(x, ((0, n_pad - n), (0, 0)))
        labels_i32 = jnp.pad(labels_i32, (0, n_pad - n),
                             constant_values=IGNORE_INDEX)
    labels2d = labels_i32.reshape(n_pad, 1)

    num_row_tiles = n_pad // tn
    num_vocab_tiles = v_phys // tv
    mask_tail = v_phys != v

    # Per-row-tile "any valid label" flag -> skip compute AND weight DMA for
    # fully prompt-masked row tiles (flag folded into the weight index_map).
    flags = jnp.any(labels2d.reshape(num_row_tiles, tn) != IGNORE_INDEX,
                    axis=1).astype(jnp.int32)

    kernel = functools.partial(_masked_ce_kernel, vocab_size=v,
                               vocab_tile=tv, mask_tail=mask_tail)

    def w_index_map(i, k, flags):
        # Freeze the weight block index on fully-masked row tiles so the
        # pipeline does not re-stream the (H, V) weight from HBM for them.
        return (0, jnp.where(flags[i] > 0, k, 0))

    cost = pl.CostEstimate(
        flops=2 * n_pad * h * v_phys,
        transcendentals=n_pad * v_phys,
        bytes_accessed=(num_row_tiles * h * v_phys * 2
                        + n_pad * h * 2 + n_pad * 4 + n_pad * 128 * 4),
    )

    vmem_limit = int(min(100 * 1024 * 1024,
                         _blocks_bytes(tn, tv) + 16 * 1024 * 1024))

    nll = pl.pallas_call(
        kernel,
        out_shape=jax.ShapeDtypeStruct((n_pad, 128), jnp.float32),
        grid_spec=pltpu.PrefetchScalarGridSpec(
            num_scalar_prefetch=1,
            grid=(num_row_tiles, num_vocab_tiles),
            in_specs=[
                pl.BlockSpec((tn, h), lambda i, k, flags: (i, 0)),
                pl.BlockSpec((h, tv), w_index_map),
                pl.BlockSpec((tn, 1), lambda i, k, flags: (i, 0)),
            ],
            out_specs=pl.BlockSpec((tn, 128), lambda i, k, flags: (i, 0)),
            scratch_shapes=[
                pltpu.VMEM((tn, 1), jnp.float32),   # running max
                pltpu.VMEM((tn, 1), jnp.float32),   # running exp-sum
                pltpu.VMEM((tn, 1), jnp.float32),   # label logit
            ],
        ),
        compiler_params=pltpu.CompilerParams(
            dimension_semantics=("parallel", "arbitrary"),
            vmem_limit_bytes=vmem_limit,
        ),
        cost_estimate=cost,
    )(flags, x, w_head, labels2d)

    # Contiguous reduction of the lane-broadcast NLL slab (avoid strided
    # lane-0 reads): every row holds 128 identical copies.
    loss_sum = jnp.sum(nll) * (1.0 / 128.0)
    count = jnp.sum((labels_i32 != IGNORE_INDEX).astype(jnp.float32))
    return loss_sum / jnp.maximum(count, 1.0)


def sft_cross_entropy_step(seq, prompt_len, emb_table, w_head_prepared, *,
                           vocab_size, row_tile=512, vocab_tile=1024):
    """Mirror of SFTTrainer.get_cross_entropy_loss with a synthetic model.

    seq        : (B, S) int32      prompt_len : (B,) int32
    emb_table  : (V, H)            w_head_prepared : (H, V_pad) bf16 (prepare_lm_head)
    """
    B, S = seq.shape
    prompt_mask = jnp.arange(S)[None, :] < prompt_len[:, None]          # (B, S)
    inp, labels = seq[:, :-1], seq[:, 1:]                               # (B, S-1)
    labels = jnp.where(prompt_mask[:, 1:], IGNORE_INDEX, labels)        # masked_fill_

    # TODO(synk): the embedding gather could be fused into the kernel with a
    # pl.Element row-gather BlockSpec + scalar-prefetched token ids; kept in
    # plain JAX since the (N,H) hidden tensor is small vs. the LM-head stream.
    hidden = emb_table[inp].reshape(B * (S - 1), -1).astype(jnp.bfloat16)
    labels = labels.reshape(B * (S - 1))
    return masked_cross_entropy_loss(hidden, w_head_prepared, labels,
                                     vocab_size=vocab_size,
                                     row_tile=row_tile, vocab_tile=vocab_tile)


if __name__ == "__main__":
    # Small shapes that still exercise: multiple row tiles (parallel axis),
    # multiple vocab tiles (online softmax), row padding, vocab padding (tail
    # mask branch), and a fully prompt-masked row tile (frozen-weight skip).
    B, S, H, V = 4, 8, 32, 200

    key = jax.random.PRNGKey(0)
    k_seq, k_emb, k_head = jax.random.split(key, 3)

    seq = jax.random.randint(k_seq, (B, S), 0, V, dtype=jnp.int32)
    prompt_len = jnp.array([3, 5, 8, 8], dtype=jnp.int32)   # batches 2,3 fully masked

    emb_table = jax.random.normal(k_emb, (V, H), dtype=jnp.float32)
    w_head = jax.random.normal(k_head, (H, V), dtype=jnp.float32) * 0.2

    # Hoisted once per training run (NOT per step): bf16 cast + vocab padding.
    w_prepared, vocab_size = prepare_lm_head(w_head, vocab_tile=128)

    loss = sft_cross_entropy_step(seq, prompt_len, emb_table, w_prepared,
                                  vocab_size=vocab_size,
                                  row_tile=16, vocab_tile=128)
    loss = jax.block_until_ready(loss)

    # Pure-JAX reference (same bf16-rounded inputs, f32 math).
    prompt_mask = jnp.arange(S)[None, :] < prompt_len[:, None]
    labels_ref = jnp.where(prompt_mask[:, 1:], IGNORE_INDEX, seq[:, 1:]).reshape(-1)
    hid_ref = emb_table[seq[:, :-1]].reshape(B * (S - 1), H)
    hid_ref = hid_ref.astype(jnp.bfloat16).astype(jnp.float32)
    w_ref = w_head.astype(jnp.bfloat16).astype(jnp.float32)
    logits_ref = jnp.dot(hid_ref, w_ref, precision=lax.Precision.HIGHEST)
    logp = jax.nn.log_softmax(logits_ref, axis=-1)
    valid = labels_ref != IGNORE_INDEX
    nll_ref = -jnp.take_along_axis(
        logp, jnp.clip(labels_ref, 0, V - 1)[:, None], axis=-1)[:, 0]
    ref_loss = jnp.sum(jnp.where(valid, nll_ref, 0.0)) / jnp.maximum(jnp.sum(valid), 1)

    assert jnp.allclose(loss, ref_loss, rtol=2e-3, atol=2e-3), (loss, ref_loss)

    print("KERNEL_OK")
</pallas_src>

<mosaic_0001>
module attributes {stable_mosaic.version = 11 : i64} {
  func.func @_masked_ce_kernel(%arg0: i32, %arg1: i32, %arg2: memref<2xi32, #tpu.memory_space<smem>>, %arg3: memref<16x32xbf16, #tpu.memory_space<vmem>>, %arg4: memref<32x128xbf16, #tpu.memory_space<vmem>>, %arg5: memref<16x1xi32, #tpu.memory_space<vmem>>, %arg6: memref<16x128xf32, #tpu.memory_space<vmem>>, %arg7: memref<16x1xf32, #tpu.memory_space<vmem>>, %arg8: memref<16x1xf32, #tpu.memory_space<vmem>>, %arg9: memref<16x1xf32, #tpu.memory_space<vmem>>) attributes {dimension_semantics = [#tpu.dimension_semantics<parallel>, #tpu.dimension_semantics<arbitrary>], iteration_bounds = array<i64: 2, 2>, scalar_prefetch = 1 : i64, scratch_operands = 3 : i64, tpu.core_type = #tpu.core_type<tc>, window_params = [{transform_indices = @transform_0, window_bounds = array<i64: 16, 32>}, {transform_indices = @transform_1, window_bounds = array<i64: 32, 128>}, {transform_indices = @transform_2, window_bounds = array<i64: 16, 1>}, {transform_indices = @transform_3, window_bounds = array<i64: 16, 128>}]} {
    %0 = arith.index_cast %arg0 : i32 to index
    %1 = memref.load %arg2[%0] : memref<2xi32, #tpu.memory_space<smem>>
    %c0_i32 = arith.constant 0 : i32
    %2 = arith.cmpi sgt, %1, %c0_i32 : i32
    %c0_i32_0 = arith.constant 0 : i32
    %3 = arith.cmpi eq, %arg1, %c0_i32_0 : i32
    %4 = arith.andi %2, %3 : i1
    %5 = arith.extui %4 : i1 to i32
    %c0_i32_1 = arith.constant 0 : i32
    %6 = arith.cmpi ne, %5, %c0_i32_1 : i32
    scf.if %6 {
      %cst = arith.constant -1.000000e+30 : f32
      %24 = vector.broadcast %cst : f32 to vector<16x1xf32>
      %c0 = arith.constant 0 : index
      %c0_9 = arith.constant 0 : index
      %25 = vector.load %arg7[%c0, %c0_9] : memref<16x1xf32, #tpu.memory_space<vmem>>, vector<16x1xf32>
      tpu.vector_store %arg7[%c0, %c0_9], %24 {strides = array<i32>} : memref<16x1xf32, #tpu.memory_space<vmem>>, vector<16x1xf32>,
      %cst_10 = arith.constant 0.000000e+00 : f32
      %26 = vector.broadcast %cst_10 : f32 to vector<16x1xf32>
      %c0_11 = arith.constant 0 : index
      %c0_12 = arith.constant 0 : index
      %27 = vector.load %arg8[%c0_11, %c0_12] : memref<16x1xf32, #tpu.memory_space<vmem>>, vector<16x1xf32>
      tpu.vector_store %arg8[%c0_11, %c0_12], %26 {strides = array<i32>} : memref<16x1xf32, #tpu.memory_space<vmem>>, vector<16x1xf32>,
      %cst_13 = arith.constant 0.000000e+00 : f32
      %28 = vector.broadcast %cst_13 : f32 to vector<16x1xf32>
      %c0_14 = arith.constant 0 : index
      %c0_15 = arith.constant 0 : index
      %29 = vector.load %arg9[%c0_14, %c0_15] : memref<16x1xf32, #tpu.memory_space<vmem>>, vector<16x1xf32>
      tpu.vector_store %arg9[%c0_14, %c0_15], %28 {strides = array<i32>} : memref<16x1xf32, #tpu.memory_space<vmem>>, vector<16x1xf32>,
    } else {
    }
    %c1_i32 = arith.constant 1 : i32
    %7 = arith.cmpi ne, %arg1, %c1_i32 : i32
    %8 = arith.andi %2, %7 : i1
    %9 = arith.extui %8 : i1 to i32
    %c0_i32_2 = arith.constant 0 : i32
    %10 = arith.cmpi ne, %9, %c0_i32_2 : i32
    scf.if %10 {
      %c0 = arith.constant 0 : index
      %c0_9 = arith.constant 0 : index
      %24 = vector.load %arg3[%c0, %c0_9] : memref<16x32xbf16, #tpu.memory_space<vmem>>, vector<16x32xbf16>
      %c0_10 = arith.constant 0 : index
      %c0_11 = arith.constant 0 : index
      %25 = vector.load %arg4[%c0_10, %c0_11] : memref<32x128xbf16, #tpu.memory_space<vmem>>, vector<32x128xbf16>
      %cst = arith.constant dense<0.000000e+00> : vector<16x128xf32>
      %26 = tpu.matmul %24, %25, %cst {dimension_numbers = #tpu.dot_dimension_numbers<[1], [0], [0], [1], [0, 0, 1, 1], [], []>} : vector<16x32xbf16>, vector<32x128xbf16>, vector<16x128xf32> -> vector<16x128xf32>
      %c128_i32 = arith.constant 128 : i32
      %27 = arith.muli %arg1, %c128_i32 : i32
      %28 = tpu.iota {dimensions = array<i32: 1>} : vector<16x128xi32>
      %29 = vector.broadcast %27 : i32 to vector<16x128xi32>
      %30 = arith.addi %29, %28 : vector<16x128xi32>
      %c0_12 = arith.constant 0 : index
      %c0_13 = arith.constant 0 : index
      %31 = vector.load %arg5[%c0_12, %c0_13] : memref<16x1xi32, #tpu.memory_space<vmem>>, vector<16x1xi32>
      %c0_14 = arith.constant 0 : index
      %c0_15 = arith.constant 0 : index
      %32 = vector.load %arg7[%c0_14, %c0_15] : memref<16x1xf32, #tpu.memory_space<vmem>>, vector<16x1xf32>
      %cst_16 = arith.constant dense<0xFF800000> : vector<16xf32>
      %33 = vector.multi_reduction <maximumf>, %26, %cst_16 [1] : vector<16x128xf32> to vector<16xf32>
      %34 = vector.shape_cast %33 : vector<16xf32> to vector<16x1xf32>
      %35 = arith.maximumf %32, %34 : vector<16x1xf32>
      %36 = arith.subf %32, %35 : vector<16x1xf32>
      %37 = math.exp %36 : vector<16x1xf32>
      %c0_17 = arith.constant 0 : index
      %c0_18 = arith.constant 0 : index
      %38 = vector.load %arg8[%c0_17, %c0_18] : memref<16x1xf32, #tpu.memory_space<vmem>>, vector<16x1xf32>
      %39 = arith.mulf %37, %38 : vector<16x1xf32>
      %40 = vector.broadcast %35 : vector<16x1xf32> to vector<16x128xf32>
      %41 = arith.subf %26, %40 : vector<16x128xf32>
      %42 = math.exp %41 : vector<16x128xf32>
      %cst_19 = arith.constant dense<0.000000e+00> : vector<16xf32>
      %43 = vector.multi_reduction <add>, %42, %cst_19 [1] : vector<16x128xf32> to vector<16xf32>
      %44 = vector.shape_cast %43 : vector<16xf32> to vector<16x1xf32>
      %45 = arith.addf %39, %44 : vector<16x1xf32>
      %c0_20 = arith.constant 0 : index
      %c0_21 = arith.constant 0 : index
      %46 = vector.load %arg8[%c0_20, %c0_21] : memref<16x1xf32, #tpu.memory_space<vmem>>, vector<16x1xf32>
      tpu.vector_store %arg8[%c0_20, %c0_21], %45 {strides = array<i32>} : memref<16x1xf32, #tpu.memory_space<vmem>>, vector<16x1xf32>,
      %c0_22 = arith.constant 0 : index
      %c0_23 = arith.constant 0 : index
      %47 = vector.load %arg9[%c0_22, %c0_23] : memref<16x1xf32, #tpu.memory_space<vmem>>, vector<16x1xf32>
      %48 = vector.broadcast %31 : vector<16x1xi32> to vector<16x128xi32>
      %49 = arith.cmpi eq, %30, %48 : vector<16x128xi32>
      %cst_24 = arith.constant 0.000000e+00 : f32
      %50 = vector.broadcast %cst_24 : f32 to vector<16x128xf32>
      %51 = arith.select %49, %26, %50 : vector<16x128xi1>, vector<16x128xf32>
      %cst_25 = arith.constant dense<0.000000e+00> : vector<16xf32>
      %52 = vector.multi_reduction <add>, %51, %cst_25 [1] : vector<16x128xf32> to vector<16xf32>
      %53 = vector.shape_cast %52 : vector<16xf32> to vector<16x1xf32>
      %54 = arith.addf %47, %53 : vector<16x1xf32>
      %c0_26 = arith.constant 0 : index
      %c0_27 = arith.constant 0 : index
      %55 = vector.load %arg9[%c0_26, %c0_27] : memref<16x1xf32, #tpu.memory_space<vmem>>, vector<16x1xf32>
      tpu.vector_store %arg9[%c0_26, %c0_27], %54 {strides = array<i32>} : memref<16x1xf32, #tpu.memory_space<vmem>>, vector<16x1xf32>,
      %c0_28 = arith.constant 0 : index
      %c0_29 = arith.constant 0 : index
      %56 = vector.load %arg7[%c0_28, %c0_29] : memref<16x1xf32, #tpu.memory_space<vmem>>, vector<16x1xf32>
      tpu.vector_store %arg7[%c0_28, %c0_29], %35 {strides = array<i32>} : memref<16x1xf32, #tpu.memory_space<vmem>>, vector<16x1xf32>,
    } else {
    }
    %c1_i32_3 = arith.constant 1 : i32
    %11 = arith.cmpi eq, %arg1, %c1_i32_3 : i32
    %12 = arith.andi %2, %11 : i1
    %13 = arith.extui %12 : i1 to i32
    %c0_i32_4 = arith.constant 0 : i32
    %14 = arith.cmpi ne, %13, %c0_i32_4 : i32
    scf.if %14 {
      %c0 = arith.constant 0 : index
      %c0_9 = arith.constant 0 : index
      %24 = vector.load %arg3[%c0, %c0_9] : memref<16x32xbf16, #tpu.memory_space<vmem>>, vector<16x32xbf16>
      %c0_10 = arith.constant 0 : index
      %c0_11 = arith.constant 0 : index
      %25 = vector.load %arg4[%c0_10, %c0_11] : memref<32x128xbf16, #tpu.memory_space<vmem>>, vector<32x128xbf16>
      %cst = arith.constant dense<0.000000e+00> : vector<16x128xf32>
      %26 = tpu.matmul %24, %25, %cst {dimension_numbers = #tpu.dot_dimension_numbers<[1], [0], [0], [1], [0, 0, 1, 1], [], []>} : vector<16x32xbf16>, vector<32x128xbf16>, vector<16x128xf32> -> vector<16x128xf32>
      %c128_i32 = arith.constant 128 : i32
      %27 = arith.muli %arg1, %c128_i32 : i32
      %28 = tpu.iota {dimensions = array<i32: 1>} : vector<16x128xi32>
      %29 = vector.broadcast %27 : i32 to vector<16x128xi32>
      %30 = arith.addi %29, %28 : vector<16x128xi32>
      %c200_i32 = arith.constant 200 : i32
      %31 = vector.broadcast %c200_i32 : i32 to vector<16x128xi32>
      %32 = arith.cmpi slt, %30, %31 : vector<16x128xi32>
      %cst_12 = arith.constant -1.000000e+30 : f32
      %33 = vector.broadcast %cst_12 : f32 to vector<16x128xf32>
      %34 = arith.select %32, %26, %33 : vector<16x128xi1>, vector<16x128xf32>
      %c0_13 = arith.constant 0 : index
      %c0_14 = arith.constant 0 : index
      %35 = vector.load %arg5[%c0_13, %c0_14] : memref<16x1xi32, #tpu.memory_space<vmem>>, vector<16x1xi32>
      %c0_15 = arith.constant 0 : index
      %c0_16 = arith.constant 0 : index
      %36 = vector.load %arg7[%c0_15, %c0_16] : memref<16x1xf32, #tpu.memory_space<vmem>>, vector<16x1xf32>
      %cst_17 = arith.constant dense<0xFF800000> : vector<16xf32>
      %37 = vector.multi_reduction <maximumf>, %34, %cst_17 [1] : vector<16x128xf32> to vector<16xf32>
      %38 = vector.shape_cast %37 : vector<16xf32> to vector<16x1xf32>
      %39 = arith.maximumf %36, %38 : vector<16x1xf32>
      %40 = arith.subf %36, %39 : vector<16x1xf32>
      %41 = math.exp %40 : vector<16x1xf32>
      %c0_18 = arith.constant 0 : index
      %c0_19 = arith.constant 0 : index
      %42 = vector.load %arg8[%c0_18, %c0_19] : memref<16x1xf32, #tpu.memory_space<vmem>>, vector<16x1xf32>
      %43 = arith.mulf %41, %42 : vector<16x1xf32>
      %44 = vector.broadcast %39 : vector<16x1xf32> to vector<16x128xf32>
      %45 = arith.subf %34, %44 : vector<16x128xf32>
      %46 = math.exp %45 : vector<16x128xf32>
      %cst_20 = arith.constant dense<0.000000e+00> : vector<16xf32>
      %47 = vector.multi_reduction <add>, %46, %cst_20 [1] : vector<16x128xf32> to vector<16xf32>
      %48 = vector.shape_cast %47 : vector<16xf32> to vector<16x1xf32>
      %49 = arith.addf %43, %48 : vector<16x1xf32>
      %c0_21 = arith.constant 0 : index
      %c0_22 = arith.constant 0 : index
      %50 = vector.load %arg8[%c0_21, %c0_22] : memref<16x1xf32, #tpu.memory_space<vmem>>, vector<16x1xf32>
      tpu.vector_store %arg8[%c0_21, %c0_22], %49 {strides = array<i32>} : memref<16x1xf32, #tpu.memory_space<vmem>>, vector<16x1xf32>,
      %c0_23 = arith.constant 0 : index
      %c0_24 = arith.constant 0 : index
      %51 = vector.load %arg9[%c0_23, %c0_24] : memref<16x1xf32, #tpu.memory_space<vmem>>, vector<16x1xf32>
      %52 = vector.broadcast %35 : vector<16x1xi32> to vector<16x128xi32>
      %53 = arith.cmpi eq, %30, %52 : vector<16x128xi32>
      %cst_25 = arith.constant 0.000000e+00 : f32
      %54 = vector.broadcast %cst_25 : f32 to vector<16x128xf32>
      %55 = arith.select %53, %34, %54 : vector<16x128xi1>, vector<16x128xf32>
      %cst_26 = arith.constant dense<0.000000e+00> : vector<16xf32>
      %56 = vector.multi_reduction <add>, %55, %cst_26 [1] : vector<16x128xf32> to vector<16xf32>
      %57 = vector.shape_cast %56 : vector<16xf32> to vector<16x1xf32>
      %58 = arith.addf %51, %57 : vector<16x1xf32>
      %c0_27 = arith.constant 0 : index
      %c0_28 = arith.constant 0 : index
      %59 = vector.load %arg9[%c0_27, %c0_28] : memref<16x1xf32, #tpu.memory_space<vmem>>, vector<16x1xf32>
      tpu.vector_store %arg9[%c0_27, %c0_28], %58 {strides = array<i32>} : memref<16x1xf32, #tpu.memory_space<vmem>>, vector<16x1xf32>,
      %c0_29 = arith.constant 0 : index
      %c0_30 = arith.constant 0 : index
      %60 = vector.load %arg7[%c0_29, %c0_30] : memref<16x1xf32, #tpu.memory_space<vmem>>, vector<16x1xf32>
      tpu.vector_store %arg7[%c0_29, %c0_30], %39 {strides = array<i32>} : memref<16x1xf32, #tpu.memory_space<vmem>>, vector<16x1xf32>,
    } else {
    }
    %c1_i32_5 = arith.constant 1 : i32
    %15 = arith.cmpi eq, %arg1, %c1_i32_5 : i32
    %16 = arith.andi %15, %2 : i1
    %17 = arith.extui %16 : i1 to i32
    %c0_i32_6 = arith.constant 0 : i32
    %18 = arith.cmpi ne, %17, %c0_i32_6 : i32
    scf.if %18 {
      %c0 = arith.constant 0 : index
      %c0_9 = arith.constant 0 : index
      %24 = vector.load %arg5[%c0, %c0_9] : memref<16x1xi32, #tpu.memory_space<vmem>>, vector<16x1xi32>
      %c-1_i32 = arith.constant -1 : i32
      %25 = vector.broadcast %c-1_i32 : i32 to vector<16x1xi32>
      %26 = arith.cmpi ne, %24, %25 : vector<16x1xi32>
      %27 = arith.extui %26 : vector<16x1xi1> to vector<16x1xi32>
      %28 = arith.sitofp %27 : vector<16x1xi32> to vector<16x1xf32>
      %c0_10 = arith.constant 0 : index
      %c0_11 = arith.constant 0 : index
      %29 = vector.load %arg7[%c0_10, %c0_11] : memref<16x1xf32, #tpu.memory_space<vmem>>, vector<16x1xf32>
      %c0_12 = arith.constant 0 : index
      %c0_13 = arith.constant 0 : index
      %30 = vector.load %arg8[%c0_12, %c0_13] : memref<16x1xf32, #tpu.memory_space<vmem>>, vector<16x1xf32>
      %31 = math.log %30 : vector<16x1xf32>
      %32 = arith.addf %29, %31 : vector<16x1xf32>
      %c0_14 = arith.constant 0 : index
      %c0_15 = arith.constant 0 : index
      %33 = vector.load %arg9[%c0_14, %c0_15] : memref<16x1xf32, #tpu.memory_space<vmem>>, vector<16x1xf32>
      %34 = arith.subf %32, %33 : vector<16x1xf32>
      %35 = arith.mulf %34, %28 : vector<16x1xf32>
      %36 = vector.shape_cast %35 : vector<16x1xf32> to vector<16x1xf32>
      %37 = vector.broadcast %36 : vector<16x1xf32> to vector<16x128xf32>
      %c0_16 = arith.constant 0 : index
      %c0_17 = arith.constant 0 : index
      %38 = vector.load %arg6[%c0_16, %c0_17] : memref<16x128xf32, #tpu.memory_space<vmem>>, vector<16x128xf32>
      tpu.vector_store %arg6[%c0_16, %c0_17], %37 {strides = array<i32>} : memref<16x128xf32, #tpu.memory_space<vmem>>, vector<16x128xf32>,
    } else {
    }
    %c1_i32_7 = arith.constant 1 : i32
    %19 = arith.cmpi eq, %arg1, %c1_i32_7 : i32
    %true = arith.constant true
    %20 = arith.xori %2, %true : i1
    %21 = arith.andi %19, %20 : i1
    %22 = arith.extui %21 : i1 to i32
    %c0_i32_8 = arith.constant 0 : i32
    %23 = arith.cmpi ne, %22, %c0_i32_8 : i32
    scf.if %23 {
      %cst = arith.constant 0.000000e+00 : f32
      %24 = vector.broadcast %cst : f32 to vector<16x128xf32>
      %c0 = arith.constant 0 : index
      %c0_9 = arith.constant 0 : index
      %25 = vector.load %arg6[%c0, %c0_9] : memref<16x128xf32, #tpu.memory_space<vmem>>, vector<16x128xf32>
      tpu.vector_store %arg6[%c0, %c0_9], %24 {strides = array<i32>} : memref<16x128xf32, #tpu.memory_space<vmem>>, vector<16x128xf32>,
    } else {
    }
    return
  }
  func.func @transform_0(%arg0: i32, %arg1: i32, %arg2: memref<2xi32, #tpu.memory_space<smem>>) -> (i32, i32) {
    %c0_i32 = arith.constant 0 : i32
    %c0_i32_0 = arith.constant 0 : i32
    return %arg0, %c0_i32 : i32, i32
  }
  func.func @transform_1(%arg0: i32, %arg1: i32, %arg2: memref<2xi32, #tpu.memory_space<smem>>) -> (i32, i32) {
    %0 = arith.index_cast %arg0 : i32 to index
    %1 = memref.load %arg2[%0] : memref<2xi32, #tpu.memory_space<smem>>
    %c0_i32 = arith.constant 0 : i32
    %2 = arith.cmpi sgt, %1, %c0_i32 : i32
    %c0_i32_0 = arith.constant 0 : i32
    %3 = arith.select %2, %arg1, %c0_i32_0 : i32
    %c0_i32_1 = arith.constant 0 : i32
    %c0_i32_2 = arith.constant 0 : i32
    return %c0_i32_1, %3 : i32, i32
  }
  func.func @transform_2(%arg0: i32, %arg1: i32, %arg2: memref<2xi32, #tpu.memory_space<smem>>) -> (i32, i32) {
    %c0_i32 = arith.constant 0 : i32
    %c0_i32_0 = arith.constant 0 : i32
    return %arg0, %c0_i32 : i32, i32
  }
  func.func @transform_3(%arg0: i32, %arg1: i32, %arg2: memref<2xi32, #tpu.memory_space<smem>>) -> (i32, i32) {
    %c0_i32 = arith.constant 0 : i32
    %c0_i32_0 = arith.constant 0 : i32
    return %arg0, %c0_i32 : i32, i32
  }
}

</mosaic_0001>

<llo_original>
// kernel: tpu_custom_call.1
$region0: #{tpu_custom_call.1}
  #allocation0 [shape = 'u32[]', space=smem, size = 0x4, offset = 0x4, fixed_abs, tag = 'smem constant byte address 0x4 - core index']
  #allocation1 [shape = 'u32[72,128]{1,0:T(1,128)}', space=vmem, size = 0x9000, scoped, tag = 'internal scratch']
  #allocation2 [shape = 'f32[16,1]{1,0:T(8,128)}', space=vmem, size = 0x2000, scoped, tag = 'scratch operand']
  #allocation3 [shape = 'f32[16,1]{1,0:T(8,128)}', space=vmem, size = 0x2000, scoped, tag = 'scratch operand']
  #allocation4 [shape = 'f32[16,1]{1,0:T(8,128)}', space=vmem, size = 0x2000, scoped, tag = 'scratch operand']
  #allocation5 [shape = 's32[1]{0}', space=sflag, size = 0x4, scoped, tag = 'scoped memory for tpu_custom_call.1']
  #allocation6 [shape = 'u8[512]{0}', space=smem, size = 0x200, scoped, tag = 'prefetched SMEM operand 0']
  %s0 = inlined_call_operand.vmem [shape: s32[2], index: 0, kind: input, shape index: {}]
  %s1 = inlined_call_operand.hbm [shape: bf16[32,32], index: 1, kind: input, shape index: {}]
  %s2 = inlined_call_operand.vmem [shape: bf16[32,256], index: 2, kind: input, shape index: {}]
  %s3 = inlined_call_operand.vmem [shape: s32[32,1], index: 3, kind: input, shape index: {}]
  %s4 = inlined_call_operand.hbm [shape: f32[32,128], index: 4, kind: output, shape index: {}]
  %s5 = sld [smem:[#allocation0]]
  $region106: #{tpu_custom_call.1} parent=0
    _
  %s7 = ssub.s32 1, %s5
  %s8 = scalar_select 0, %s7, %s5
  %s10 = sshll.u32 %s0, 4
  %s11 = int_to_ptr.vmem [resolvable:$true] %s10
  %13 = dma.vmem_to_smem %s11, 16, [#allocation6], [#allocation5]
  %15 = dma.done [#allocation5], 16
  %16 = sfence
  $region1: #{tpu_custom_call.1} parent=0
    #allocation7 [shape = 'u8[8192]{0}', space=vmem, size = 0x2000, scoped, tag = 'input window, operand 1']
    #allocation8 [shape = 's32[2]{0}', space=sflag, size = 0x8, scoped, tag = 'scoped memory for tpu_custom_call.1']
    #allocation9 [shape = 's32[2]{0}', space=sflag, size = 0x8, scoped, tag = 'scoped memory for tpu_custom_call.1']
    #allocation10 [shape = 'u8[16384]{0}', space=vmem, size = 0x4000, scoped, tag = 'input window, operand 2']
    #allocation11 [shape = 'u8[16384]{0}', space=vmem, size = 0x4000, scoped, tag = 'output window, operand 0']
    %17 = vsyncpa [#allocation8], 0
    %s18 = scalar_lea.sflag [#allocation8], 1
    %19 = vsyncpa %s18, 0
    %20 = vsyncpa [#allocation9], 0
    %s21 = scalar_lea.sflag [#allocation9], 1
    %22 = vsyncpa %s21, 0
    loop: start=0, step=1, limit=6
    $region2: #{tpu_custom_call.1} parent=1 // loop_pre_header
      _
    $region3: #{tpu_custom_call.1} parent=1 // loop_header
      %s24 = sphi 0, %s28
      %p25 = scmp.ge.s32.totalorder %s24, 6
      %s31 = sphi 0, %s43
      %s32 = sphi 0, %s39
      %s33 = sphi 0, %s31
      %s34 = sphi 0, %s32
      %s35 = sphi 0, %s33
      %s36 = sphi 0, %s34
      %s46 = sphi 0, %s48
      %s49 = sphi 0, %s46
      %s50 = sphi 0, %s49
      %s66 = sphi 0, %s50
      %s78 = sphi 0, %s80
      %s81 = sphi 0, %s78
      %s82 = sphi 0, %s81
      %s98 = sphi 0, %s82
      %s104 = sphi 0, %s106
      %s107 = sphi 0, %s104
      %s108 = sphi 0, %s107
      %s124 = sphi 0, %s108
      %s130 = sphi 0, %s132
      %s133 = sphi 0, %s130
      %s134 = sphi 0, %s133
      %s150 = sphi 0, %s134
    $region4: #{tpu_custom_call.1} parent=1 // loop_header_branch
      %27 = sbr.rel (%p25) target = $region8
    $region5: #{tpu_custom_call.1} parent=1 // loop_body
      %s29 = ssub.s32 %s24, 1
      %s30 = ssub.s32 %s24, 2
      %s37 = sadd.s32 1, %s32
      %p38 = scmp.ge.s32.totalorder %s37, 2
      %s39 = scalar_select %p38, 0, %s37
      %s40 = sadd.s32 1, %s31
      %s41 = scalar_select %p38, %s40, %s31
      %p42 = scmp.ge.s32.totalorder %s41, 2
      %s43 = scalar_select %p42, 0, %s41
      %s44 = ssub.s32 %s31, %s43
      %p45 = scmp.eq.s32.totalorder %s44, 0
      %s47 = sadd.s32 %s46, 1
      %s48 = scalar_select %p45, %s46, %s47
      %p51 = pneg %p45
      %p52 = scmp.eq.s32.totalorder %s24, 3
      %p53 = por %p51, %p52
      %p54 = scmp.ne.s32.totalorder %s46, %s49
      %p55 = scmp.eq.s32.totalorder %s24, 0
      %p56 = por %p54, %p55
      %p57 = scmp.ne.s32.totalorder %s46, %s49
      %p58 = scmp.eq.s32.totalorder %s29, 3
      %p59 = por %p57, %p58
      %p60 = scmp.ne.s32.totalorder %s49, %s50
      %p61 = scmp.eq.s32.totalorder %s29, 0
      %p62 = por %p60, %p61
      %p63 = scmp.ne.s32.totalorder %s49, %s50
      %p64 = scmp.eq.s32.totalorder %s30, 3
      %p65 = por %p63, %p64
      %p67 = scmp.ne.s32.totalorder %s50, %s66
      %p68 = scmp.eq.s32.totalorder %s30, 0
      %p69 = por %p67, %p68
      %s70 = sld [smem:[#allocation6 + %s31]]
      %p71 = scmp.gt.s32.totalorder %s70, 0
      %s72 = scalar_select %p71, %s32, 0
      %s73 = sld [smem:[#allocation6 + %s43]]
      %p74 = scmp.gt.s32.totalorder %s73, 0
      %s75 = scalar_select %p74, %s39, 0
      %s76 = ssub.s32 %s72, %s75
      %p77 = scmp.eq.s32.totalorder %s76, 0
      %s79 = sadd.s32 %s78, 1
      %s80 = scalar_select %p77, %s78, %s79
      %p83 = pneg %p77
      %p84 = scmp.eq.s32.totalorder %s24, 3
      %p85 = por %p83, %p84
      %p86 = scmp.ne.s32.totalorder %s78, %s81
      %p87 = scmp.eq.s32.totalorder %s24, 0
      %p88 = por %p86, %p87
      %p89 = scmp.ne.s32.totalorder %s78, %s81
      %p90 = scmp.eq.s32.totalorder %s29, 3
      %p91 = por %p89, %p90
      %p92 = scmp.ne.s32.totalorder %s81, %s82
      %p93 = scmp.eq.s32.totalorder %s29, 0
      %p94 = por %p92, %p93
      %p95 = scmp.ne.s32.totalorder %s81, %s82
      %p96 = scmp.eq.s32.totalorder %s30, 3
      %p97 = por %p95, %p96
      %p99 = scmp.ne.s32.totalorder %s82, %s98
      %p100 = scmp.eq.s32.totalorder %s30, 0
      %p101 = por %p99, %p100
      %s102 = ssub.s32 %s31, %s43
      %p103 = scmp.eq.s32.totalorder %s102, 0
      %s105 = sadd.s32 %s104, 1
      %s106 = scalar_select %p103, %s104, %s105
      %p109 = pneg %p103
      %p110 = scmp.eq.s32.totalorder %s24, 3
      %p111 = por %p109, %p110
      %p112 = scmp.ne.s32.totalorder %s104, %s107
      %p113 = scmp.eq.s32.totalorder %s24, 0
      %p114 = por %p112, %p113
      %p115 = scmp.ne.s32.totalorder %s104, %s107
      %p116 = scmp.eq.s32.totalorder %s29, 3
      %p117 = por %p115, %p116
      %p118 = scmp.ne.s32.totalorder %s107, %s108
      %p119 = scmp.eq.s32.totalorder %s29, 0
      %p120 = por %p118, %p119
      %p121 = scmp.ne.s32.totalorder %s107, %s108
      %p122 = scmp.eq.s32.totalorder %s30, 3
      %p123 = por %p121, %p122
      %p125 = scmp.ne.s32.totalorder %s108, %s124
      %p126 = scmp.eq.s32.totalorder %s30, 0
      %p127 = por %p125, %p126
      %s128 = ssub.s32 %s31, %s43
      %p129 = scmp.eq.s32.totalorder %s128, 0
      %s131 = sadd.s32 %s130, 1
      %s132 = scalar_select %p129, %s130, %s131
      %p135 = pneg %p129
      %p136 = scmp.eq.s32.totalorder %s24, 3
      %p137 = por %p135, %p136
      %p138 = scmp.ne.s32.totalorder %s130, %s133
      %p139 = scmp.eq.s32.totalorder %s24, 0
      %p140 = por %p138, %p139
      %p141 = scmp.ne.s32.totalorder %s130, %s133
      %p142 = scmp.eq.s32.totalorder %s29, 3
      %p143 = por %p141, %p142
      %p144 = scmp.ne.s32.totalorder %s133, %s134
      %p145 = scmp.eq.s32.totalorder %s29, 0
      %p146 = por %p144, %p145
      %p147 = scmp.ne.s32.totalorder %s133, %s134
      %p148 = scmp.eq.s32.totalorder %s30, 3
      %p149 = por %p147, %p148
      %p151 = scmp.ne.s32.totalorder %s134, %s150
      %p152 = scmp.eq.s32.totalorder %s30, 0
      %p153 = por %p151, %p152
      %p154 = scmp.le.s32.totalorder 1, %s24
      %p155 = scmp.lt.s32.totalorder %s24, 5
      %p156 = pnand %p154, %p155
      %p157 = pneg %p156
      // Predicated region
      $region9: #{tpu_custom_call.1} parent=5 // pred_check
        _
      $region10: #{tpu_custom_call.1} parent=5 // pred_check_branch
        %159 = sbr.rel (%p156) target = $region12
      $region11: #{tpu_custom_call.1} parent=5 // pred_region
        %s160 = ssub.s32 %s24, 1
      $region12: #{tpu_custom_call.1} parent=5 // pred_fallthru
        _
      %p161 = scmp.lt.s32.totalorder %s24, 4
      // Predicated region
      $region13: #{tpu_custom_call.1} parent=5 // pred_check
        %p162 = pneg %p161
      $region14: #{tpu_custom_call.1} parent=5 // pred_check_branch
        %164 = sbr.rel (%p162) target = $region16
      $region15: #{tpu_custom_call.1} parent=5 // pred_region
        // Predicated region
        $region17: #{tpu_custom_call.1} parent=15 // pred_check
          %p165 = pneg %p56
        $region18: #{tpu_custom_call.1} parent=15 // pred_check_branch
          %167 = sbr.rel (%p165) target = $region20
        $region19: #{tpu_custom_call.1} parent=15 // pred_region
          %s168 = sand.u32 %s46, 1
          %s169 = scalar_lea.sflag [#allocation8], %s168
          %s170 = sand.u32 %s46, 1
          %s171 = smul.addr %s170, 8
          %s172 = scalar_lea.vmem [#allocation7], %s171
          %s173 = smul.u32 2, %s31
          %175 = vsyncadd %s169, 0
          %s176 = smul.addr %s173, 4
          %s177 = scalar_lea.hbm %s1, %s176
          %s178 = sshll.u32 %s177, 4
          %s179 = int_to_ptr.hbm [resolvable:$true] %s178
          %s180 = sshll.u32 %s172, 4
          %s181 = int_to_ptr.vmem [resolvable:$true] %s180
          %186 = dma.hbm_to_vmem [thread:$0]  %s179, 128, %s181, %s169, 64, 64, 4
        $region20: #{tpu_custom_call.1} parent=15 // pred_fallthru
          _
        // Predicated region
        $region21: #{tpu_custom_call.1} parent=15 // pred_check
          %p187 = pneg %p88
        $region22: #{tpu_custom_call.1} parent=15 // pred_check_branch
          %189 = sbr.rel (%p187) target = $region24
        $region23: #{tpu_custom_call.1} parent=15 // pred_region
          %s190 = sand.u32 %s78, 1
          %s191 = sand.u32 %s78, 1
          %s192 = smul.addr %s191, 16
          %s193 = scalar_lea.vmem [#allocation10], %s192
          %s194 = sld [smem:[#allocation6 + %s31]]
          %p195 = scmp.gt.s32.totalorder %s194, 0
          %s196 = scalar_select %p195, %s32, 0
          %s197 = smul.addr %s196, 4
          %s198 = scalar_lea.vmem %s2, %s197
          // Predicated region
          $region25: #{tpu_custom_call.1} parent=23 // pred_check
            _
          $region26: #{tpu_custom_call.1} parent=23 // pred_check_branch
            %200 = sbr.rel (0) target = $region28
          $region27: #{tpu_custom_call.1} parent=23 // pred_region
            // Predicated region
            $region29: #{tpu_custom_call.1} parent=27 // pred_check
              _
            $region30: #{tpu_custom_call.1} parent=27 // pred_check_branch
              %202 = sbr.rel target = $region32
            $region31: #{tpu_custom_call.1} parent=27 // pred_region
              // Predicated region
              $region44: #{tpu_custom_call.1} parent=31 // pred_check
                _
              $region45: #{tpu_custom_call.1} parent=31 // pred_check_branch
                %224 = sbr.rel (0) target = $region47
              $region46: #{tpu_custom_call.1} parent=31 // pred_region
                loop: start=0, step=1, limit=1
                $region48: #{tpu_custom_call.1} parent=46 // loop_pre_header
                  _
                $region49: #{tpu_custom_call.1} parent=46 // loop_header
                  %s226 = sphi 0, %s230
                  %p227 = scmp.ge.s32.totalorder %s226, 1
                  %s231 = sphi %s198, %s198
                  %s232 = sphi %s193, %s193
                $region50: #{tpu_custom_call.1} parent=46 // loop_header_branch
                  %229 = sbr.rel (%p227) target = $region54
                $region51: #{tpu_custom_call.1} parent=46 // loop_body
                  _
                $region52: #{tpu_custom_call.1} parent=46 // loop_footer
                  %s230 = sadd.s32 1, %s226
                $region53: #{tpu_custom_call.1} parent=46 // loop_footer_branch
                  %225 = sbr.rel target = $region49
                $region54: #{tpu_custom_call.1} parent=46 // loop_exit
                  _
                %s234 = ssub.s32 16, 1
                loop: start=0, step=1, limit=1
                $region55: #{tpu_custom_call.1} parent=46 // loop_pre_header
                  _
                $region56: #{tpu_custom_call.1} parent=46 // loop_header
                  %s236 = sphi 0, %s240
                  %p237 = scmp.ge.s32.totalorder %s236, 1
                  %s241 = sphi %s198, %s198
                  %s242 = sphi %s193, %s193
                $region57: #{tpu_custom_call.1} parent=46 // loop_header_branch
                  %239 = sbr.rel (%p237) target = $region61
                $region58: #{tpu_custom_call.1} parent=46 // loop_body
                  %v243 = vld [vmem:[%s241] sm:%s234]
                  %244 = vst [vmem:[%s242] sm:%s234] %v243
                  %v245 = vld [vmem:[%s241 + $0x8] sm:%s234]
                  %246 = vst [vmem:[%s242 + $0x4] sm:%s234] %v245
                  %v247 = vld [vmem:[%s241 + $0x10] sm:%s234]
                  %248 = vst [vmem:[%s242 + $0x8] sm:%s234] %v247
                  %v249 = vld [vmem:[%s241 + $0x18] sm:%s234]
                  %250 = vst [vmem:[%s242 + $0xc] sm:%s234] %v249
                $region59: #{tpu_custom_call.1} parent=46 // loop_footer
                  %s240 = sadd.s32 1, %s236
                $region60: #{tpu_custom_call.1} parent=46 // loop_footer_branch
                  %235 = sbr.rel target = $region56
                $region61: #{tpu_custom_call.1} parent=46 // loop_exit
                  _
              $region47: #{tpu_custom_call.1} parent=31 // pred_fallthru
                _
            $region32: #{tpu_custom_call.1} parent=27 // pred_fallthru
              _
            // Predicated region
            $region33: #{tpu_custom_call.1} parent=27 // pred_check
              _
            $region34: #{tpu_custom_call.1} parent=27 // pred_check_branch
              %204 = sbr.rel (0) target = $region36
            $region35: #{tpu_custom_call.1} parent=27 // pred_region
              %s206 = ssub.s32 16, 1
              loop: start=0, step=1, limit=1
              $region37: #{tpu_custom_call.1} parent=35 // loop_pre_header
                _
              $region38: #{tpu_custom_call.1} parent=35 // loop_header
                %s208 = sphi 0, %s212
                %p209 = scmp.ge.s32.totalorder %s208, 1
                %s213 = sphi %s198, %s198
                %s214 = sphi %s193, %s193
              $region39: #{tpu_custom_call.1} parent=35 // loop_header_branch
                %211 = sbr.rel (%p209) target = $region43
              $region40: #{tpu_custom_call.1} parent=35 // loop_body
                %v215 = vld [vmem:[%s213] sm:%s206]
                %216 = vst [vmem:[%s214] sm:%s206] %v215
                %v217 = vld [vmem:[%s213 + $0x8] sm:%s206]
                %218 = vst [vmem:[%s214 + $0x4] sm:%s206] %v217
                %v219 = vld [vmem:[%s213 + $0x10] sm:%s206]
                %220 = vst [vmem:[%s214 + $0x8] sm:%s206] %v219
                %v221 = vld [vmem:[%s213 + $0x18] sm:%s206]
                %222 = vst [vmem:[%s214 + $0xc] sm:%s206] %v221
              $region41: #{tpu_custom_call.1} parent=35 // loop_footer
                %s212 = sadd.s32 1, %s208
              $region42: #{tpu_custom_call.1} parent=35 // loop_footer_branch
                %207 = sbr.rel target = $region38
              $region43: #{tpu_custom_call.1} parent=35 // loop_exit
                _
            $region36: #{tpu_custom_call.1} parent=27 // pred_fallthru
              _
          $region28: #{tpu_custom_call.1} parent=23 // pred_fallthru
            _
          %251 = vnop
        $region24: #{tpu_custom_call.1} parent=15 // pred_fallthru
          _
        // Predicated region
        $region62: #{tpu_custom_call.1} parent=15 // pred_check
          %p252 = pneg %p114
        $region63: #{tpu_custom_call.1} parent=15 // pred_check_branch
          %254 = sbr.rel (%p252) target = $region65
        $region64: #{tpu_custom_call.1} parent=15 // pred_region
          %s255 = smul.u32 2, %s31
          %p256 = scmp.lt.s32.totalorder %s255, 3
          %s257 = scalar_select %p256, %s255, 3
          %s258 = smul.addr %s257, 8
          %s259 = scalar_lea.vmem %s3, %s258
          %s260 = smul.u32 2, %s31
        $region65: #{tpu_custom_call.1} parent=15 // pred_fallthru
          _
      $region16: #{tpu_custom_call.1} parent=5 // pred_fallthru
        _
      %p261 = scmp.le.s32.totalorder 1, %s24
      %p262 = scmp.lt.s32.totalorder %s24, 5
      %p263 = pnand %p261, %p262
      %p264 = pneg %p263
      // Predicated region
      $region66: #{tpu_custom_call.1} parent=5 // pred_check
        _
      $region67: #{tpu_custom_call.1} parent=5 // pred_check_branch
        %266 = sbr.rel (%p263) target = $region69
      $region68: #{tpu_custom_call.1} parent=5 // pred_region
        %s267 = ssub.s32 %s24, 1
        %s268 = sand.u32 %s49, 1
        %s269 = scalar_lea.sflag [#allocation8], %s268
        %s270 = sand.u32 %s49, 1
        %s271 = smul.addr %s270, 8
        %s272 = scalar_lea.vmem [#allocation7], %s271
        // Predicated region
        $region70: #{tpu_custom_call.1} parent=68 // pred_check
          %p273 = pneg %p62
        $region71: #{tpu_custom_call.1} parent=68 // pred_check_branch
          %275 = sbr.rel (%p273) target = $region73
        $region72: #{tpu_custom_call.1} parent=68 // pred_region
          %277 = dma.done %s269, 128
        $region73: #{tpu_custom_call.1} parent=68 // pred_fallthru
          _
        %s278 = sand.u32 %s81, 1
        %s279 = sand.u32 %s81, 1
        %s280 = smul.addr %s279, 16
        %s281 = scalar_lea.vmem [#allocation10], %s280
        // Predicated region
        $region74: #{tpu_custom_call.1} parent=68 // pred_check
          %p282 = pneg %p94
        $region75: #{tpu_custom_call.1} parent=68 // pred_check_branch
          %284 = sbr.rel (%p282) target = $region77
        $region76: #{tpu_custom_call.1} parent=68 // pred_region
          _
        $region77: #{tpu_custom_call.1} parent=68 // pred_fallthru
          _
        %s285 = sand.u32 %s49, 1
        %s286 = scalar_lea.sflag [#allocation8], %s285
        %s287 = sand.u32 %s49, 1
        %s288 = smul.addr %s287, 8
        %s289 = scalar_lea.vmem [#allocation7], %s288
        %p290 = pneg %p62
        %p291 = pneg %p59
        %s292 = sand.u32 %s81, 1
        %s293 = sand.u32 %s81, 1
        %s294 = smul.addr %s293, 16
        %s295 = scalar_lea.vmem [#allocation10], %s294
        %p296 = pneg %p94
        %p297 = pneg %p91
        %s298 = smul.u32 2, %s33
        %p299 = scmp.lt.s32.totalorder %s298, 3
        %s300 = scalar_select %p299, %s298, 3
        %s301 = smul.addr %s300, 8
        %s302 = scalar_lea.vmem %s3, %s301
        %p303 = pneg %p120
        %p304 = pneg %p117
        %p305 = pneg %p146
        %p306 = pneg %p143
        %s307 = sand.u32 %s133, 1
        %s308 = scalar_lea.sflag [#allocation9], %s307
        %s309 = sand.u32 %s133, 1
        %s310 = smul.addr %s309, 16
        %s311 = scalar_lea.vmem [#allocation11], %s310
        %s312 = smul.u32 2, %s33
        %s313 = sld [smem:[#allocation6 + %s33]]
        %p314 = scmp.gt.s32.totalorder %s313, 0
        %s315 = scalar_select %p314, %s34, 0
        %s316 = smul.u32 2, %s33
        %p317 = scmp.lt.s32.totalorder %s316, 3
        %s318 = scalar_select %p317, %s316, 3
        %s319 = smul.addr %s318, 8
        %s320 = scalar_lea.vmem %s3, %s319
        %s321 = smul.u32 2, %s33
        %s322 = smul.u32 2, %s33
        %s324 = sld [smem:[#allocation6 + %s33]]
        %p325 = scmp.gt.s32.totalorder %s324, 0
        %p326 = scmp.eq.s32.totalorder %s34, 0
        %p327 = pnand %p325, %p326
        %p328 = pneg %p327
        // Predicated region
        $region78: #{tpu_custom_call.1} parent=68 // pred_check
          _
        $region79: #{tpu_custom_call.1} parent=68 // pred_check_branch
          %330 = sbr.rel (%p327) target = $region81
        $region80: #{tpu_custom_call.1} parent=68 // pred_region
          %vm331 = vcmask 7168
          %332 = vst.msk [vmem:[#allocation2] sm:$0xff] %vm331, -1e+30
          %333 = vst.msk [vmem:[#allocation2 + $0x8] sm:$0xff] %vm331, -1e+30
          %334 = vst.msk [vmem:[#allocation3] sm:$0xff] %vm331, 0.0
          %335 = vst.msk [vmem:[#allocation3 + $0x8] sm:$0xff] %vm331, 0.0
          %336 = vst.msk [vmem:[#allocation4] sm:$0xff] %vm331, 0.0
          %337 = vst.msk [vmem:[#allocation4 + $0x8] sm:$0xff] %vm331, 0.0
        $region81: #{tpu_custom_call.1} parent=68 // pred_fallthru
          _
        %p338 = scmp.ne.s32.totalorder %s34, 1
        %p339 = pnand %p325, %p338
        %p340 = pneg %p339
        // Predicated region
        $region82: #{tpu_custom_call.1} parent=68 // pred_check
          _
        $region83: #{tpu_custom_call.1} parent=68 // pred_check_branch
          %342 = sbr.rel (%p339) target = $region85
        $region84: #{tpu_custom_call.1} parent=68 // pred_region
          %v343 = vld [vmem:[%s272] sm:$0xf]
          %v344 = vld [vmem:[%s272 + $0x4] sm:$0xf]
          %v345 = vld [vmem:[%s281] sm:$0xf]
          %v346 = vld [vmem:[%s281 + $0x4] sm:$0xf]
          %v347 = vld [vmem:[%s281 + $0x8] sm:$0xf]
          %v348 = vld [vmem:[%s281 + $0xc] sm:$0xf]
          %v351 = vunpack.c.l.b16 %v343
          %v352 = vunpack.c.l.b16 %v344
          %v353 = vpack.c.b16 %v352, %v351
          %v358 = vunpack.c.l.b16 %v345
          %v359 = vunpack.c.l.b16 %v346
          %v360 = vunpack.c.l.b16 %v347
          %v361 = vunpack.c.l.b16 %v348
          %v362 = vpack.c.b16 %v359, %v358
          %v363 = vpack.c.b16 %v361, %v360
          %vm366 = vcmask 261120
          %v368 = vsel %vm366, %v353, 0
          %370 = vmatpush.bf16.msra.mxu0 0
          %371 = vmatpush.bf16.msra.mxu0 0
          %372 = vmatpush.bf16.msra.mxu0 0
          %373 = vmatpush.bf16.msra.mxu0 0
          %374 = vmatpush.bf16.msra.mxu0 0
          %375 = vmatpush.bf16.msra.mxu0 0
          %376 = vmatpush.bf16.msra.mxu0 %v363
          %377 = vmatpush.bf16.msra.mxu0 %v362
          %378 = vmatmul.bf16.gmra.mxu0 %v368
          %v379 = vpop.f32.mrf.mxu0
          %v380 = vadd.f32 0.0, %v379
          %v381 = vpop.f32.mrf.mxu0
          %v382 = vadd.f32 0.0, %v381
          %383 = vdwg.mxu0
          %s384 = smul.u32 %s34, 128
          %v385 = vlaneseq
          %v386 = vand.u32 %v385, 127
          %v387 = vstv %s384
          %v388 = vadd.s32 %v387, %v386
          %v389 = vld [vmem:[%s320] sm:$0xff]
          %v390 = vld [vmem:[%s320 + $0x8] sm:$0xff]
          %v391 = vld [vmem:[#allocation2] sm:$0xff]
          %v392 = vld [vmem:[#allocation2 + $0x8] sm:$0xff]
          %393 = vmax.xlane.f32.xlu0 %v380
          %v394 = vpop.xlane.xlu0 %393
          %395 = vmax.xlane.f32.xlu0 %v382
          %v396 = vpop.xlane.xlu0 %395
          %v397 = vmax.f32 %v391, %v394
          %v398 = vmax.f32 %v392, %v396
          %v399 = vsub.f32 %v391, %v397
          %v400 = vsub.f32 %v392, %v398
          %v401 = vmul.f32 %v399, 1.442695
          %v402 = vpow.pop %v401
          %v403 = vmul.f32 %v400, 1.442695
          %v404 = vpow.pop %v403
          %v405 = vld [vmem:[#allocation3] sm:$0xff]
          %v406 = vld [vmem:[#allocation3 + $0x8] sm:$0xff]
          %v407 = vmul.f32 %v402, %v405
          %v408 = vmul.f32 %v404, %v406
          %410 = vset.pattern.permute.xlu0 0
          %411 = vperm.xlu0 %410, %v397
          %v412 = vpop.permute.xlu0 %411
          %415 = vset.pattern.permute.xlu0 0
          %416 = vperm.xlu0 %415, %v398
          %v417 = vpop.permute.xlu0 %416
          %v419 = vsub.f32 %v380, %v412
          %v420 = vsub.f32 %v382, %v417
          %v421 = vmul.f32 %v419, 1.442695
          %v422 = vpow.pop %v421
          %v423 = vmul.f32 %v420, 1.442695
          %v424 = vpow.pop %v423
          %425 = vadd.xlane.f32.xlu0 %v422
          %v426 = vpop.xlane.xlu0 %425
          %427 = vadd.xlane.f32.xlu0 %v424
          %v428 = vpop.xlane.xlu0 %427
          %v429 = vadd.f32 %v407, %v426
          %v430 = vadd.f32 %v408, %v428
          %vm431 = vcmask 7168
          %432 = vst.msk [vmem:[#allocation3] sm:$0xff] %vm431, %v429
          %433 = vst.msk [vmem:[#allocation3 + $0x8] sm:$0xff] %vm431, %v430
          %v434 = vld [vmem:[#allocation4] sm:$0xff]
          %v435 = vld [vmem:[#allocation4 + $0x8] sm:$0xff]
          %436 = vset.pattern.permute.xlu0 0
          %437 = vperm.xlu0 %436, %v389
          %v438 = vpop.permute.xlu0 %437
          %439 = vset.pattern.permute.xlu0 0
          %440 = vperm.xlu0 %439, %v390
          %v441 = vpop.permute.xlu0 %440
          %vm442 = vcmp.eq.s32.totalorder %v388, %v438
          %vm443 = vcmp.eq.s32.totalorder %v388, %v441
          %v444 = vsel %vm442, %v380, 0.0
          %v445 = vsel %vm443, %v382, 0.0
          %446 = vadd.xlane.f32.xlu0 %v444
          %v447 = vpop.xlane.xlu0 %446
          %448 = vadd.xlane.f32.xlu0 %v445
          %v449 = vpop.xlane.xlu0 %448
          %v450 = vadd.f32 %v434, %v447
          %v451 = vadd.f32 %v435, %v449
          %452 = vst.msk [vmem:[#allocation4] sm:$0xff] %vm431, %v450
          %453 = vst.msk [vmem:[#allocation4 + $0x8] sm:$0xff] %vm431, %v451
          %454 = vst.msk [vmem:[#allocation2] sm:$0xff] %vm431, %v397
          %455 = vst.msk [vmem:[#allocation2 + $0x8] sm:$0xff] %vm431, %v398
        $region85: #{tpu_custom_call.1} parent=68 // pred_fallthru
          _
        %p456 = scmp.eq.s32.totalorder %s34, 1
        %p457 = pnand %p325, %p456
        %p458 = pneg %p457
        // Predicated region
        $region86: #{tpu_custom_call.1} parent=68 // pred_check
          _
        $region87: #{tpu_custom_call.1} parent=68 // pred_check_branch
          %460 = sbr.rel (%p457) target = $region89
        $region88: #{tpu_custom_call.1} parent=68 // pred_region
          %v461 = vld [vmem:[%s272] sm:$0xf]
          %v462 = vld [vmem:[%s272 + $0x4] sm:$0xf]
          %v463 = vld [vmem:[%s281] sm:$0xf]
          %v464 = vld [vmem:[%s281 + $0x4] sm:$0xf]
          %v465 = vld [vmem:[%s281 + $0x8] sm:$0xf]
          %v466 = vld [vmem:[%s281 + $0xc] sm:$0xf]
          %v469 = vunpack.c.l.b16 %v461
          %v470 = vunpack.c.l.b16 %v462
          %v471 = vpack.c.b16 %v470, %v469
          %v476 = vunpack.c.l.b16 %v463
          %v477 = vunpack.c.l.b16 %v464
          %v478 = vunpack.c.l.b16 %v465
          %v479 = vunpack.c.l.b16 %v466
          %v480 = vpack.c.b16 %v477, %v476
          %v481 = vpack.c.b16 %v479, %v478
          %vm484 = vcmask 261120
          %v486 = vsel %vm484, %v471, 0
          %488 = vmatpush.bf16.msra.mxu0 0
          %489 = vmatpush.bf16.msra.mxu0 0
          %490 = vmatpush.bf16.msra.mxu0 0
          %491 = vmatpush.bf16.msra.mxu0 0
          %492 = vmatpush.bf16.msra.mxu0 0
          %493 = vmatpush.bf16.msra.mxu0 0
          %494 = vmatpush.bf16.msra.mxu0 %v481
          %495 = vmatpush.bf16.msra.mxu0 %v480
          %496 = vmatmul.bf16.gmra.mxu0 %v486
          %v497 = vpop.f32.mrf.mxu0
          %v498 = vadd.f32 0.0, %v497
          %v499 = vpop.f32.mrf.mxu0
          %v500 = vadd.f32 0.0, %v499
          %501 = vdwg.mxu0
          %s502 = smul.u32 %s34, 128
          %v503 = vlaneseq
          %v504 = vand.u32 %v503, 127
          %v505 = vstv %s502
          %v506 = vadd.s32 %v505, %v504
          %vm507 = vcmp.lt.s32.totalorder %v506, 200
          %v508 = vsel %vm507, %v498, -1e+30
          %v509 = vsel %vm507, %v500, -1e+30
          %v510 = vld [vmem:[%s320] sm:$0xff]
          %v511 = vld [vmem:[%s320 + $0x8] sm:$0xff]
          %v512 = vld [vmem:[#allocation2] sm:$0xff]
          %v513 = vld [vmem:[#allocation2 + $0x8] sm:$0xff]
          %514 = vmax.xlane.f32.xlu0 %v508
          %v515 = vpop.xlane.xlu0 %514
          %516 = vmax.xlane.f32.xlu0 %v509
          %v517 = vpop.xlane.xlu0 %516
          %v518 = vmax.f32 %v512, %v515
          %v519 = vmax.f32 %v513, %v517
          %v520 = vsub.f32 %v512, %v518
          %v521 = vsub.f32 %v513, %v519
          %v522 = vmul.f32 %v520, 1.442695
          %v523 = vpow.pop %v522
          %v524 = vmul.f32 %v521, 1.442695
          %v525 = vpow.pop %v524
          %v526 = vld [vmem:[#allocation3] sm:$0xff]
          %v527 = vld [vmem:[#allocation3 + $0x8] sm:$0xff]
          %v528 = vmul.f32 %v523, %v526
          %v529 = vmul.f32 %v525, %v527
          %531 = vset.pattern.permute.xlu0 0
          %532 = vperm.xlu0 %531, %v518
          %v533 = vpop.permute.xlu0 %532
          %536 = vset.pattern.permute.xlu0 0
          %537 = vperm.xlu0 %536, %v519
          %v538 = vpop.permute.xlu0 %537
          %v540 = vsub.f32 %v508, %v533
          %v541 = vsub.f32 %v509, %v538
          %v542 = vmul.f32 %v540, 1.442695
          %v543 = vpow.pop %v542
          %v544 = vmul.f32 %v541, 1.442695
          %v545 = vpow.pop %v544
          %546 = vadd.xlane.f32.xlu0 %v543
          %v547 = vpop.xlane.xlu0 %546
          %548 = vadd.xlane.f32.xlu0 %v545
          %v549 = vpop.xlane.xlu0 %548
          %v550 = vadd.f32 %v528, %v547
          %v551 = vadd.f32 %v529, %v549
          %vm552 = vcmask 7168
          %553 = vst.msk [vmem:[#allocation3] sm:$0xff] %vm552, %v550
          %554 = vst.msk [vmem:[#allocation3 + $0x8] sm:$0xff] %vm552, %v551
          %v555 = vld [vmem:[#allocation4] sm:$0xff]
          %v556 = vld [vmem:[#allocation4 + $0x8] sm:$0xff]
          %557 = vset.pattern.permute.xlu0 0
          %558 = vperm.xlu0 %557, %v510
          %v559 = vpop.permute.xlu0 %558
          %560 = vset.pattern.permute.xlu0 0
          %561 = vperm.xlu0 %560, %v511
          %v562 = vpop.permute.xlu0 %561
          %vm563 = vcmp.eq.s32.totalorder %v506, %v559
          %vm564 = vcmp.eq.s32.totalorder %v506, %v562
          %v565 = vsel %vm563, %v508, 0.0
          %v566 = vsel %vm564, %v509, 0.0
          %567 = vadd.xlane.f32.xlu0 %v565
          %v568 = vpop.xlane.xlu0 %567
          %569 = vadd.xlane.f32.xlu0 %v566
          %v570 = vpop.xlane.xlu0 %569
          %v571 = vadd.f32 %v555, %v568
          %v572 = vadd.f32 %v556, %v570
          %573 = vst.msk [vmem:[#allocation4] sm:$0xff] %vm552, %v571
          %574 = vst.msk [vmem:[#allocation4 + $0x8] sm:$0xff] %vm552, %v572
          %575 = vst.msk [vmem:[#allocation2] sm:$0xff] %vm552, %v518
          %576 = vst.msk [vmem:[#allocation2 + $0x8] sm:$0xff] %vm552, %v519
          %v577 = vld [vmem:[%s320] sm:$0xff]
          %v578 = vld [vmem:[%s320 + $0x8] sm:$0xff]
          %vm579 = vcmp.ne.s32.totalorder %v577, 4294967295
          %vm580 = vcmp.ne.s32.totalorder %v578, 4294967295
          %v581 = vsel %vm579, 1, 0
          %v582 = vsel %vm580, 1, 0
          %v583 = vcvt.s32.f32 %v581
          %v584 = vcvt.s32.f32 %v582
          %v585 = vld [vmem:[#allocation2] sm:$0xff]
          %v586 = vld [vmem:[#allocation2 + $0x8] sm:$0xff]
          %v587 = vld [vmem:[#allocation3] sm:$0xff]
          %v588 = vld [vmem:[#allocation3 + $0x8] sm:$0xff]
          %v589 = vlog2.pop %v587
          %v590 = vmul.f32 %v589, 0.6931472
          %v591 = vlog2.pop %v588
          %v592 = vmul.f32 %v591, 0.6931472
          %v593 = vadd.f32 %v585, %v590
          %v594 = vadd.f32 %v586, %v592
          %v595 = vld [vmem:[#allocation4] sm:$0xff]
          %v596 = vld [vmem:[#allocation4 + $0x8] sm:$0xff]
          %v597 = vsub.f32 %v593, %v595
          %v598 = vsub.f32 %v594, %v596
          %v599 = vmul.f32 %v597, %v583
          %v600 = vmul.f32 %v598, %v584
          %602 = vset.pattern.permute.xlu0 0
          %603 = vperm.xlu0 %602, %v599
          %v604 = vpop.permute.xlu0 %603
          %607 = vset.pattern.permute.xlu0 0
          %608 = vperm.xlu0 %607, %v600
          %v609 = vpop.permute.xlu0 %608
          %611 = vst [vmem:[%s311] sm:$0xff] %v604
          %612 = vst [vmem:[%s311 + $0x8] sm:$0xff] %v609
        $region89: #{tpu_custom_call.1} parent=68 // pred_fallthru
          _
        %p613 = scmp.le.s32.totalorder %s324, 0
        %p614 = pnand %p456, %p613
        %p615 = pneg %p614
        // Predicated region
        $region90: #{tpu_custom_call.1} parent=68 // pred_check
          _
        $region91: #{tpu_custom_call.1} parent=68 // pred_check_branch
          %617 = sbr.rel (%p614) target = $region93
        $region92: #{tpu_custom_call.1} parent=68 // pred_region
          %618 = vst [vmem:[%s311] sm:$0xff] 0.0
          %619 = vst [vmem:[%s311 + $0x8] sm:$0xff] 0.0
        $region93: #{tpu_custom_call.1} parent=68 // pred_fallthru
          _
        %s620 = sand.u32 %s133, 1
        %s621 = scalar_lea.sflag [#allocation9], %s620
        %s622 = sand.u32 %s133, 1
        %s623 = smul.addr %s622, 16
        %s624 = scalar_lea.vmem [#allocation11], %s623
        // Predicated region
        $region94: #{tpu_custom_call.1} parent=68 // pred_check
          %p625 = pneg %p143
        $region95: #{tpu_custom_call.1} parent=68 // pred_check_branch
          %627 = sbr.rel (%p625) target = $region97
        $region96: #{tpu_custom_call.1} parent=68 // pred_region
          %s628 = smul.u32 2, %s33
          %630 = vsyncadd %s621, 0
          %s631 = smul.addr %s628, 8
          %s632 = scalar_lea.hbm %s4, %s631
          %s633 = sshll.u32 %s624, 4
          %s634 = int_to_ptr.vmem [resolvable:$true] %s633
          %s635 = sshll.u32 %s632, 4
          %s636 = int_to_ptr.hbm [resolvable:$true] %s635
          %641 = dma.vmem_to_hbm [thread:$0]  %s634, 256, %s636, %s621, 128, 128, 8
        $region97: #{tpu_custom_call.1} parent=68 // pred_fallthru
          _
      $region69: #{tpu_custom_call.1} parent=5 // pred_fallthru
        _
      %p642 = scmp.le.s32.totalorder 2, %s24
      // Predicated region
      $region98: #{tpu_custom_call.1} parent=5 // pred_check
        %p643 = pneg %p642
      $region99: #{tpu_custom_call.1} parent=5 // pred_check_branch
        %645 = sbr.rel (%p643) target = $region101
      $region100: #{tpu_custom_call.1} parent=5 // pred_region
        %s646 = ssub.s32 %s24, 2
        // Predicated region
        $region102: #{tpu_custom_call.1} parent=100 // pred_check
          %p647 = pneg %p149
        $region103: #{tpu_custom_call.1} parent=100 // pred_check_branch
          %649 = sbr.rel (%p647) target = $region105
        $region104: #{tpu_custom_call.1} parent=100 // pred_region
          %s650 = sand.u32 %s134, 1
          %s651 = scalar_lea.sflag [#allocation9], %s650
          %s652 = sand.u32 %s134, 1
          %s653 = smul.addr %s652, 16
          %s654 = scalar_lea.vmem [#allocation11], %s653
          %656 = dma.done %s651, 256
        $region105: #{tpu_custom_call.1} parent=100 // pred_fallthru
          _
      $region101: #{tpu_custom_call.1} parent=5 // pred_fallthru
        _
    $region6: #{tpu_custom_call.1} parent=1 // loop_footer
      %s28 = sadd.s32 1, %s24
    $region7: #{tpu_custom_call.1} parent=1 // loop_footer_branch
      %23 = sbr.rel target = $region3
    $region8: #{tpu_custom_call.1} parent=1 // loop_exit
      _
    %657 = vsyncpa [#allocation8], 1
    %s658 = scalar_lea.sflag [#allocation8], 1
    %659 = vsyncpa %s658, 1
    %660 = vsyncpa [#allocation9], 1
    %s661 = scalar_lea.sflag [#allocation9], 1
    %662 = vsyncpa %s661, 1

</llo_original>
